<compile_context>
chip_gen: v5e
topology: v5e:2x2
jax: 0.10.0
libtpu: 0.0.40
codegen_flags: <defaults>
</compile_context>

<pallas_src>
import functools

import jax
import jax.numpy as jnp
from jax.experimental import pallas as pl
from jax.experimental.pallas import tpu as pltpu


def _round_up(x, m):
    return (x + m - 1) // m * m


# ----------------------------------------------------------------------------
# Parameter prep: fold BN scale into the bf16 weights, pad channels to 128.
# ----------------------------------------------------------------------------
def _prep_params(layer_params, in_channels):
    prepped = []
    cprev_real = in_channels
    cprev_pad = _round_up(in_channels, 128)
    for (w, scale, shift) in layer_params:
        cn = w.shape[1]
        cn_pad = _round_up(cn, 128)
        w_fold = (w * scale).astype(jnp.bfloat16)           # fold BN scale
        w_p = jnp.zeros((cprev_pad, cn_pad), jnp.bfloat16)
        w_p = w_p.at[:cprev_real, :cn].set(w_fold)
        b_p = jnp.zeros((1, cn_pad), jnp.float32).at[:, :cn].set(shift)
        prepped.append((w_p, b_p))
        cprev_real, cprev_pad = cn, cn_pad
    return prepped, cprev_pad


# ----------------------------------------------------------------------------
# Kernel A: per-point MLP (1x1 conv -> folded BN -> ReLU) x width, row-tiled.
# ----------------------------------------------------------------------------
def _pointwise_mlp_kernel(width, x_ref, *refs):
    out_ref = refs[-1]
    params = refs[:-1]                       # (w0, shift0, w1, shift1, ...)
    h = x_ref[...]                           # (TN, C_prev_pad) bf16
    for i in range(width):
        w = params[2 * i][...]               # bf16 (C_prev_pad, C_next_pad)
        shift = params[2 * i + 1][...]       # f32  (1, C_next_pad)
        acc = jnp.dot(h, w, preferred_element_type=jnp.float32)
        acc = jnp.maximum(acc + shift, 0.0)
        h = acc.astype(jnp.bfloat16)
    out_ref[...] = h


# ----------------------------------------------------------------------------
# Kernel B: gather transformed rows (one-hot matmul, slab-tiled over N) + max
# over the group.
# ----------------------------------------------------------------------------
def _gather_max_kernel(group_pad, slab, idx_ref, tbl_ref, out_ref):
    r = idx_ref.shape[0]                     # TS * G_pad rows in this tile
    n_pad = tbl_ref.shape[0]
    c = tbl_ref.shape[1]
    ts = out_ref.shape[0]
    idx = idx_ref[...]                       # (R, 1) int32

    def slab_step(i, h):
        off = pl.multiple_of(i * slab, slab)
        tbl = tbl_ref[pl.ds(off, slab), :]                           # bf16
        iota = jax.lax.broadcasted_iota(jnp.int32, (r, slab), 1) + off
        onehot = (idx == iota).astype(jnp.bfloat16)                  # direct cast
        return h + jnp.dot(onehot, tbl, preferred_element_type=jnp.float32)

    h = jax.lax.fori_loop(0, n_pad // slab, slab_step,
                          jnp.zeros((r, c), jnp.float32))
    out_ref[...] = jnp.max(h.reshape(ts, group_pad, c), axis=1)


# ----------------------------------------------------------------------------
# Tile derivation under a hard VMEM budget (includes gather transients).
# ----------------------------------------------------------------------------
def _choose_sample_tile(S, G_pad, N_pad, c_pad, slab, budget_bytes=24 << 20):
    # fixed: double-buffered table blocks + one table slab value + slack
    fixed = 2 * N_pad * c_pad * 2 + slab * c_pad * 2 + (1 << 20)
    # per gathered row: idx(2x i32) + iota(i32)+onehot(bf16) + h/out f32 copies
    per_row = 8 + 6 * slab + 8 * c_pad + (8 * c_pad) // max(G_pad, 1)
    avail = max(budget_bytes - fixed, per_row * 8 * G_pad)
    ts = int(avail // per_row) // G_pad
    ts = max(8, min(ts, 256, _round_up(S, 8)))
    return (ts // 8) * 8


# ----------------------------------------------------------------------------
# Wrapper: per-point MLP + gather/group-max via two pallas_calls.
# ----------------------------------------------------------------------------
def sa_mlp_pallas(pts_fea, idx, layer_params):
    """pts_fea: (B, N, C_in) f32. idx: (B, S, G) int32 neighbor row indices.
    Returns (B, S, C_out) f32 = max over the group of MLP(gathered features)."""
    B, N, Cin = pts_fea.shape
    _, S, G = idx.shape
    width = len(layer_params)
    c_out = layer_params[-1][0].shape[1]

    cin_pad = _round_up(Cin, 128)
    prepped, cout_pad = _prep_params(layer_params, Cin)
    flat_params = [a for pair in prepped for a in pair]

    # ---- per-point table, padded so the gather slab evenly divides N_pad ----
    SLAB = 512 if N > 512 else _round_up(N, 8)
    N_pad = _round_up(N, SLAB)
    fea_pad = jnp.zeros((B, N_pad, cin_pad), jnp.bfloat16)
    fea_pad = fea_pad.at[:, :N, :Cin].set(pts_fea.astype(jnp.bfloat16))

    ROWS = B * N_pad
    TN = min(256, ROWS)
    ROWS_pad = _round_up(ROWS, TN)
    fea_rows = fea_pad.reshape(ROWS, cin_pad)
    if ROWS_pad > ROWS:
        fea_rows = jnp.concatenate(
            [fea_rows, jnp.zeros((ROWS_pad - ROWS, cin_pad), jnp.bfloat16)], axis=0)

    pad_sizes = [cin_pad] + [p[0].shape[1] for p in prepped]
    param_bytes = sum(int(p.size) * p.dtype.itemsize for p in flat_params)

    # -------------------- kernel A: per-point MLP --------------------
    in_specs_a = [pl.BlockSpec((TN, cin_pad), lambda r: (r, 0))]
    for (w_p, b_p) in prepped:
        in_specs_a.append(pl.BlockSpec(w_p.shape, lambda r: (0, 0)))
        in_specs_a.append(pl.BlockSpec(b_p.shape, lambda r: (0, 0)))
    out_specs_a = pl.BlockSpec((TN, cout_pad), lambda r: (r, 0))

    max_c = max(pad_sizes)
    est_a = (2 * TN * cin_pad * 2 + 2 * TN * cout_pad * 2 + 2 * param_bytes
             + TN * max_c * 8)
    vmem_a = int(min(max(3 * est_a // 2, 16 << 20), 40 << 20))
    flops_a = 2 * ROWS_pad * sum(a * b for a, b in zip(pad_sizes[:-1], pad_sizes[1:]))
    bytes_a = ROWS_pad * (cin_pad + cout_pad) * 2 + param_bytes

    table_rows = pl.pallas_call(
        functools.partial(_pointwise_mlp_kernel, width),
        out_shape=jax.ShapeDtypeStruct((ROWS_pad, cout_pad), jnp.bfloat16),
        grid=(ROWS_pad // TN,),
        in_specs=in_specs_a,
        out_specs=out_specs_a,
        compiler_params=pltpu.CompilerParams(
            dimension_semantics=("parallel",), vmem_limit_bytes=vmem_a),
        cost_estimate=pl.CostEstimate(
            flops=int(flops_a), transcendentals=0, bytes_accessed=int(bytes_a)),
    )(fea_rows, *flat_params)
    table = table_rows[:ROWS].reshape(B, N_pad, cout_pad)

    # -------------------- kernel B: gather + group max --------------------
    idx = idx.astype(jnp.int32)
    G_pad = _round_up(max(G, 8), 8)
    if G_pad > G:   # duplicate nearest neighbor; max is duplicate-invariant
        idx = jnp.concatenate(
            [idx, jnp.broadcast_to(idx[:, :, :1], (B, S, G_pad - G))], axis=-1)

    TS = _choose_sample_tile(S, G_pad, N_pad, cout_pad, SLAB)
    S_pad = _round_up(S, TS)
    if S_pad > S:
        idx = jnp.concatenate(
            [idx, jnp.zeros((B, S_pad - S, G_pad), jnp.int32)], axis=1)
    idx_rows = idx.reshape(B, S_pad * G_pad, 1)

    R = TS * G_pad
    est_b = (2 * R * 4 + 2 * N_pad * cout_pad * 2 + 2 * TS * cout_pad * 4
             + R * SLAB * 6 + SLAB * cout_pad * 2 + 2 * R * cout_pad * 4)
    vmem_b = int(min(max(3 * est_b // 2, 16 << 20), 40 << 20))
    flops_b = 2 * B * S_pad * G_pad * N_pad * cout_pad
    bytes_b = (int(idx_rows.size) * 4 + B * N_pad * cout_pad * 2
               + B * S_pad * cout_pad * 4)

    out_pad = pl.pallas_call(
        functools.partial(_gather_max_kernel, G_pad, SLAB),
        out_shape=jax.ShapeDtypeStruct((B, S_pad, cout_pad), jnp.float32),
        grid=(B, S_pad // TS),
        in_specs=[
            pl.BlockSpec((None, R, 1), lambda b, t: (b, t, 0)),
            pl.BlockSpec((None, N_pad, cout_pad), lambda b, t: (b, 0, 0)),
        ],
        out_specs=pl.BlockSpec((None, TS, cout_pad), lambda b, t: (b, t, 0)),
        compiler_params=pltpu.CompilerParams(
            dimension_semantics=("parallel", "arbitrary"),
            vmem_limit_bytes=vmem_b),
        cost_estimate=pl.CostEstimate(
            flops=int(flops_b), transcendentals=0, bytes_accessed=int(bytes_b)),
    )(idx_rows, table)

    return out_pad[:, :S, :c_out]


# ----------------------------------------------------------------------------
# Glue: sampling + neighbor selection (plain JAX stand-in, indices only).
# ----------------------------------------------------------------------------
def sampling_grouping(pts_co, pts_fea, n_sample, radius, group_size,
                      distance=None, sample=None):
    B, N, _ = pts_co.shape
    if sample is None:
        stride = max(N // n_sample, 1)
        sample = jnp.broadcast_to(
            jnp.arange(n_sample, dtype=jnp.int32) * stride, (B, n_sample))
    new_pts_co = jnp.take_along_axis(pts_co, sample[..., None], axis=1)
    if distance is None:
        diff = new_pts_co[:, :, None, :] - pts_co[:, None, :, :]
        distance = jnp.sum(diff * diff, axis=-1)             # (B, S, N) sq dist
    neg_d, idx = jax.lax.top_k(-distance, group_size)        # kNN, no full sort
    d_sel = -neg_d
    idx = jnp.where(d_sel <= radius * radius, idx, idx[:, :, :1]).astype(jnp.int32)
    return new_pts_co, idx, distance, sample


# ----------------------------------------------------------------------------
# Parameter init: Conv2d(in, out, 1) + BatchNorm2d(out), BN folded to affine.
# ----------------------------------------------------------------------------
def init_sa_params(key, in_channels, layer_sizes):
    params = []
    in_fea = in_channels
    eps = 1e-5
    for out_c in layer_sizes:
        key, k_w, k_b = jax.random.split(key, 3)
        w = jax.random.normal(k_w, (in_fea, out_c), jnp.float32) * 0.1
        b_conv = jax.random.normal(k_b, (out_c,), jnp.float32) * 0.1
        gamma = 1.0 + 0.01 * jnp.arange(out_c, dtype=jnp.float32)
        beta = 0.02 * jnp.arange(out_c, dtype=jnp.float32)
        r_mean = 0.01 * jnp.arange(out_c, dtype=jnp.float32)
        r_var = 1.0 + 0.05 * jnp.arange(out_c, dtype=jnp.float32)
        scale = gamma / jnp.sqrt(r_var + eps)
        shift = (b_conv - r_mean) * scale + beta
        params.append((w, scale.reshape(1, out_c), shift.reshape(1, out_c)))
        in_fea = out_c
    return params


def sa_forward(params, n_sample, radius, group_size, pts_co, pts_fea,
               distance=None, sample=None):
    new_co, idx, dist, samples = sampling_grouping(
        pts_co, pts_fea, n_sample, radius, group_size, distance, sample)
    new_fea = sa_mlp_pallas(pts_fea, idx, params)     # (B, n_sample, C_out)
    return new_co, new_fea, dist, samples


# plain-JAX reference (grouped-domain order, same folded bf16-matmul numerics)
def _sa_mlp_ref(pts_fea, idx, layer_params):
    grouped = jax.vmap(lambda f, i: f[i])(pts_fea, idx)          # (B, S, G, C)
    h = grouped.astype(jnp.bfloat16)
    for (w, scale, shift) in layer_params:
        w_f = (w * scale).astype(jnp.bfloat16)
        acc = jnp.einsum('bsgc,cd->bsgd', h, w_f,
                         preferred_element_type=jnp.float32)
        h = jnp.maximum(acc + shift, 0.0).astype(jnp.bfloat16)
    return jnp.max(h.astype(jnp.float32), axis=2)


if __name__ == "__main__":
    key = jax.random.PRNGKey(0)
    B, N, C_in = 2, 64, 16
    n_sample, radius, group_size = 16, 0.4, 8
    layer_sizes = [32, 64]

    k_co, k_fea, k_p = jax.random.split(key, 3)
    pts_co = jax.random.uniform(k_co, (B, N, 3), jnp.float32)
    pts_fea = jax.random.normal(k_fea, (B, N, C_in), jnp.float32)
    params = init_sa_params(k_p, C_in, layer_sizes)

    new_co, new_fea, dist, samples = sa_forward(
        params, n_sample, radius, group_size, pts_co, pts_fea)
    jax.block_until_ready(new_fea)

    # sanity check vs. plain-JAX reference of the hot path
    _, idx, _, _ = sampling_grouping(
        pts_co, pts_fea, n_sample, radius, group_size)
    ref = _sa_mlp_ref(pts_fea, idx, params)
    assert new_fea.shape == (B, n_sample, layer_sizes[-1])
    assert new_co.shape == (B, n_sample, 3)
    max_err = float(jnp.max(jnp.abs(new_fea - ref)))
    assert jnp.allclose(new_fea, ref, rtol=2e-2, atol=2e-2), max_err
    print("KERNEL_OK")
</pallas_src>

<mosaic_0001>
module attributes {stable_mosaic.version = 11 : i64} {
  func.func @_pointwise_mlp_kernel(%arg0: i32, %arg1: memref<128x128xbf16, #tpu.memory_space<vmem>>, %arg2: memref<128x128xbf16, #tpu.memory_space<vmem>>, %arg3: memref<1x128xf32, #tpu.memory_space<vmem>>, %arg4: memref<128x128xbf16, #tpu.memory_space<vmem>>, %arg5: memref<1x128xf32, #tpu.memory_space<vmem>>, %arg6: memref<128x128xbf16, #tpu.memory_space<vmem>>) attributes {dimension_semantics = [#tpu.dimension_semantics<parallel>], iteration_bounds = array<i64: 1>, scalar_prefetch = 0 : i64, scratch_operands = 0 : i64, tpu.core_type = #tpu.core_type<tc>, window_params = [{transform_indices = @transform_0, window_bounds = array<i64: 128, 128>}, {pipeline_mode = #tpu.pipeline_mode<synchronous>, transform_indices = @transform_1, window_bounds = array<i64: 128, 128>}, {pipeline_mode = #tpu.pipeline_mode<synchronous>, transform_indices = @transform_2, window_bounds = array<i64: 1, 128>}, {pipeline_mode = #tpu.pipeline_mode<synchronous>, transform_indices = @transform_3, window_bounds = array<i64: 128, 128>}, {pipeline_mode = #tpu.pipeline_mode<synchronous>, transform_indices = @transform_4, window_bounds = array<i64: 1, 128>}, {transform_indices = @transform_5, window_bounds = array<i64: 128, 128>}]} {
    %c0 = arith.constant 0 : index
    %c0_0 = arith.constant 0 : index
    %0 = vector.load %arg1[%c0, %c0_0] : memref<128x128xbf16, #tpu.memory_space<vmem>>, vector<128x128xbf16>
    %c0_1 = arith.constant 0 : index
    %c0_2 = arith.constant 0 : index
    %1 = vector.load %arg2[%c0_1, %c0_2] : memref<128x128xbf16, #tpu.memory_space<vmem>>, vector<128x128xbf16>
    %c0_3 = arith.constant 0 : index
    %c0_4 = arith.constant 0 : index
    %2 = vector.load %arg3[%c0_3, %c0_4] : memref<1x128xf32, #tpu.memory_space<vmem>>, vector<1x128xf32>
    %cst = arith.constant dense<0.000000e+00> : vector<128x128xf32>
    %3 = tpu.matmul %0, %1, %cst {dimension_numbers = #tpu.dot_dimension_numbers<[1], [0], [0], [1], [0, 0, 1, 1], [], []>} : vector<128x128xbf16>, vector<128x128xbf16>, vector<128x128xf32> -> vector<128x128xf32>
    %4 = vector.broadcast %2 : vector<1x128xf32> to vector<128x128xf32>
    %5 = arith.addf %3, %4 : vector<128x128xf32>
    %cst_5 = arith.constant 0.000000e+00 : f32
    %6 = vector.broadcast %cst_5 : f32 to vector<128x128xf32>
    %7 = arith.maximumf %5, %6 : vector<128x128xf32>
    %8 = arith.truncf %7 : vector<128x128xf32> to vector<128x128xbf16>
    %c0_6 = arith.constant 0 : index
    %c0_7 = arith.constant 0 : index
    %9 = vector.load %arg4[%c0_6, %c0_7] : memref<128x128xbf16, #tpu.memory_space<vmem>>, vector<128x128xbf16>
    %c0_8 = arith.constant 0 : index
    %c0_9 = arith.constant 0 : index
    %10 = vector.load %arg5[%c0_8, %c0_9] : memref<1x128xf32, #tpu.memory_space<vmem>>, vector<1x128xf32>
    %cst_10 = arith.constant dense<0.000000e+00> : vector<128x128xf32>
    %11 = tpu.matmul %8, %9, %cst_10 {dimension_numbers = #tpu.dot_dimension_numbers<[1], [0], [0], [1], [0, 0, 1, 1], [], []>} : vector<128x128xbf16>, vector<128x128xbf16>, vector<128x128xf32> -> vector<128x128xf32>
    %12 = vector.broadcast %10 : vector<1x128xf32> to vector<128x128xf32>
    %13 = arith.addf %11, %12 : vector<128x128xf32>
    %cst_11 = arith.constant 0.000000e+00 : f32
    %14 = vector.broadcast %cst_11 : f32 to vector<128x128xf32>
    %15 = arith.maximumf %13, %14 : vector<128x128xf32>
    %16 = arith.truncf %15 : vector<128x128xf32> to vector<128x128xbf16>
    %c0_12 = arith.constant 0 : index
    %c0_13 = arith.constant 0 : index
    %17 = vector.load %arg6[%c0_12, %c0_13] : memref<128x128xbf16, #tpu.memory_space<vmem>>, vector<128x128xbf16>
    tpu.vector_store %arg6[%c0_12, %c0_13], %16 {strides = array<i32>} : memref<128x128xbf16, #tpu.memory_space<vmem>>, vector<128x128xbf16>,
    return
  }
  func.func @transform_0(%arg0: i32) -> (i32, i32) {
    %c0_i32 = arith.constant 0 : i32
    %c0_i32_0 = arith.constant 0 : i32
    return %arg0, %c0_i32 : i32, i32
  }
  func.func @transform_1(%arg0: i32) -> (i32, i32) {
    %c0_i32 = arith.constant 0 : i32
    %c0_i32_0 = arith.constant 0 : i32
    %c0_i32_1 = arith.constant 0 : i32
    return %c0_i32, %c0_i32_0 : i32, i32
  }
  func.func @transform_2(%arg0: i32) -> (i32, i32) {
    %c0_i32 = arith.constant 0 : i32
    %c0_i32_0 = arith.constant 0 : i32
    %c0_i32_1 = arith.constant 0 : i32
    return %c0_i32, %c0_i32_0 : i32, i32
  }
  func.func @transform_3(%arg0: i32) -> (i32, i32) {
    %c0_i32 = arith.constant 0 : i32
    %c0_i32_0 = arith.constant 0 : i32
    %c0_i32_1 = arith.constant 0 : i32
    return %c0_i32, %c0_i32_0 : i32, i32
  }
  func.func @transform_4(%arg0: i32) -> (i32, i32) {
    %c0_i32 = arith.constant 0 : i32
    %c0_i32_0 = arith.constant 0 : i32
    %c0_i32_1 = arith.constant 0 : i32
    return %c0_i32, %c0_i32_0 : i32, i32
  }
  func.func @transform_5(%arg0: i32) -> (i32, i32) {
    %c0_i32 = arith.constant 0 : i32
    %c0_i32_0 = arith.constant 0 : i32
    return %arg0, %c0_i32 : i32, i32
  }
}

</mosaic_0001>

<llo_original>
// kernel: tpu_custom_call.1
$region0: #{tpu_custom_call.1}
  #allocation0 [shape = 'u32[]', space=smem, size = 0x4, offset = 0x4, fixed_abs, tag = 'smem constant byte address 0x4 - core index']
  #allocation1 [shape = 'u32[72,128]{1,0:T(1,128)}', space=vmem, size = 0x9000, scoped, tag = 'internal scratch']
  %s0 = inlined_call_operand.hbm [shape: bf16[128,128], index: 0, kind: input, shape index: {}]
  %s1 = inlined_call_operand.hbm [shape: bf16[128,128], index: 1, kind: input, shape index: {}]
  %s2 = inlined_call_operand.vmem [shape: f32[1,128], index: 2, kind: input, shape index: {}]
  %s3 = inlined_call_operand.hbm [shape: bf16[128,128], index: 3, kind: input, shape index: {}]
  %s4 = inlined_call_operand.vmem [shape: f32[1,128], index: 4, kind: input, shape index: {}]
  %s5 = inlined_call_operand.hbm [shape: bf16[128,128], index: 5, kind: output, shape index: {}]
  %s6 = sld [smem:[#allocation0]]
  $region42: #{tpu_custom_call.1} parent=0
    _
  %s8 = ssub.s32 1, %s6
  %s9 = scalar_select 0, %s8, %s6
  $region1: #{tpu_custom_call.1} parent=0
    #allocation2 [shape = 'u8[32768]{0}', space=vmem, size = 0x8000, scoped, tag = 'input window, operand 0, single buffered']
    #allocation3 [shape = 's32[1]{0}', space=sflag, size = 0x4, scoped, tag = 'scoped memory for tpu_custom_call.1']
    #allocation4 [shape = 's32[1]{0}', space=sflag, size = 0x4, scoped, tag = 'scoped memory for tpu_custom_call.1']
    #allocation5 [shape = 'u8[32768]{0}', space=vmem, size = 0x8000, scoped, tag = 'input window, operand 1, single buffered']
    #allocation6 [shape = 's32[1]{0}', space=sflag, size = 0x4, scoped, tag = 'scoped memory for tpu_custom_call.1']
    #allocation7 [shape = 'u8[32768]{0}', space=vmem, size = 0x8000, scoped, tag = 'input window, operand 3, single buffered']
    #allocation8 [shape = 'u8[32768]{0}', space=vmem, size = 0x8000, scoped, tag = 'output window, operand 0, single buffered']
    %10 = vsyncpa [#allocation3], 0
    %11 = vsyncpa [#allocation6], 0
    %12 = vsyncpa [#allocation4], 0
    // Predicated region
    $region2: #{tpu_custom_call.1} parent=1 // pred_check
      _
    $region3: #{tpu_custom_call.1} parent=1 // pred_check_branch
      %14 = sbr.rel (0) target = $region5
    $region4: #{tpu_custom_call.1} parent=1 // pred_region
      %16 = vsyncadd [#allocation3], 0
      %s17 = sshll.u32 %s0, 4
      %s18 = int_to_ptr.hbm [resolvable:$true] %s17
      %s19 = sshll.u32 [#allocation2], 4
      %s20 = int_to_ptr.vmem [resolvable:$true] %s19
      %25 = dma.hbm_to_vmem [thread:$0]  %s18, 1024, %s20, [#allocation3], 64, 64, 4
    $region5: #{tpu_custom_call.1} parent=1 // pred_fallthru
      _
    // Predicated region
    $region6: #{tpu_custom_call.1} parent=1 // pred_check
      _
    $region7: #{tpu_custom_call.1} parent=1 // pred_check_branch
      %27 = sbr.rel (0) target = $region9
    $region8: #{tpu_custom_call.1} parent=1 // pred_region
      %29 = vsyncadd [#allocation6], 0
      %s30 = sshll.u32 %s1, 4
      %s31 = int_to_ptr.hbm [resolvable:$true] %s30
      %s32 = sshll.u32 [#allocation5], 4
      %s33 = int_to_ptr.vmem [resolvable:$true] %s32
      %38 = dma.hbm_to_vmem [thread:$0]  %s31, 1024, %s33, [#allocation6], 64, 64, 4
    $region9: #{tpu_custom_call.1} parent=1 // pred_fallthru
      _
    // Predicated region
    $region10: #{tpu_custom_call.1} parent=1 // pred_check
      _
    $region11: #{tpu_custom_call.1} parent=1 // pred_check_branch
      %40 = sbr.rel (0) target = $region13
    $region12: #{tpu_custom_call.1} parent=1 // pred_region
      _
    $region13: #{tpu_custom_call.1} parent=1 // pred_fallthru
      _
    // Predicated region
    $region14: #{tpu_custom_call.1} parent=1 // pred_check
      _
    $region15: #{tpu_custom_call.1} parent=1 // pred_check_branch
      %42 = sbr.rel (0) target = $region17
    $region16: #{tpu_custom_call.1} parent=1 // pred_region
      %44 = vsyncadd [#allocation6], 0
      %s45 = sshll.u32 %s3, 4
      %s46 = int_to_ptr.hbm [resolvable:$true] %s45
      %s47 = sshll.u32 [#allocation7], 4
      %s48 = int_to_ptr.vmem [resolvable:$true] %s47
      %53 = dma.hbm_to_vmem [thread:$0]  %s46, 1024, %s48, [#allocation6], 64, 64, 4
    $region17: #{tpu_custom_call.1} parent=1 // pred_fallthru
      _
    // Predicated region
    $region18: #{tpu_custom_call.1} parent=1 // pred_check
      _
    $region19: #{tpu_custom_call.1} parent=1 // pred_check_branch
      %55 = sbr.rel (0) target = $region21
    $region20: #{tpu_custom_call.1} parent=1 // pred_region
      _
    $region21: #{tpu_custom_call.1} parent=1 // pred_fallthru
      _
    // Predicated region
    $region22: #{tpu_custom_call.1} parent=1 // pred_check
      _
    $region23: #{tpu_custom_call.1} parent=1 // pred_check_branch
      %57 = sbr.rel (0) target = $region25
    $region24: #{tpu_custom_call.1} parent=1 // pred_region
      %59 = dma.done [#allocation3], 1024
    $region25: #{tpu_custom_call.1} parent=1 // pred_fallthru
      _
    // Predicated region
    $region26: #{tpu_custom_call.1} parent=1 // pred_check
      _
    $region27: #{tpu_custom_call.1} parent=1 // pred_check_branch
      %61 = sbr.rel (0) target = $region29
    $region28: #{tpu_custom_call.1} parent=1 // pred_region
      %63 = dma.done [#allocation6], 1024
    $region29: #{tpu_custom_call.1} parent=1 // pred_fallthru
      _
    // Predicated region
    $region30: #{tpu_custom_call.1} parent=1 // pred_check
      _
    $region31: #{tpu_custom_call.1} parent=1 // pred_check_branch
      %65 = sbr.rel (0) target = $region33
    $region32: #{tpu_custom_call.1} parent=1 // pred_region
      %67 = dma.done [#allocation6], 1024
    $region33: #{tpu_custom_call.1} parent=1 // pred_fallthru
      _
    %v68 = vld [vmem:[#allocation2] sm:$0xf]
    %v69 = vld [vmem:[#allocation2 + $0x4] sm:$0xf]
    %v70 = vld [vmem:[#allocation2 + $0x8] sm:$0xf]
    %v71 = vld [vmem:[#allocation2 + $0xc] sm:$0xf]
    %v72 = vld [vmem:[#allocation2 + $0x10] sm:$0xf]
    %v73 = vld [vmem:[#allocation2 + $0x14] sm:$0xf]
    %v74 = vld [vmem:[#allocation2 + $0x18] sm:$0xf]
    %v75 = vld [vmem:[#allocation2 + $0x1c] sm:$0xf]
    %v76 = vld [vmem:[#allocation2 + $0x20] sm:$0xf]
    %v77 = vld [vmem:[#allocation2 + $0x24] sm:$0xf]
    %v78 = vld [vmem:[#allocation2 + $0x28] sm:$0xf]
    %v79 = vld [vmem:[#allocation2 + $0x2c] sm:$0xf]
    %v80 = vld [vmem:[#allocation2 + $0x30] sm:$0xf]
    %v81 = vld [vmem:[#allocation2 + $0x34] sm:$0xf]
    %v82 = vld [vmem:[#allocation2 + $0x38] sm:$0xf]
    %v83 = vld [vmem:[#allocation2 + $0x3c] sm:$0xf]
    %v84 = vld [vmem:[#allocation5] sm:$0xf]
    %v85 = vld [vmem:[#allocation5 + $0x4] sm:$0xf]
    %v86 = vld [vmem:[#allocation5 + $0x8] sm:$0xf]
    %v87 = vld [vmem:[#allocation5 + $0xc] sm:$0xf]
    %v88 = vld [vmem:[#allocation5 + $0x10] sm:$0xf]
    %v89 = vld [vmem:[#allocation5 + $0x14] sm:$0xf]
    %v90 = vld [vmem:[#allocation5 + $0x18] sm:$0xf]
    %v91 = vld [vmem:[#allocation5 + $0x1c] sm:$0xf]
    %v92 = vld [vmem:[#allocation5 + $0x20] sm:$0xf]
    %v93 = vld [vmem:[#allocation5 + $0x24] sm:$0xf]
    %v94 = vld [vmem:[#allocation5 + $0x28] sm:$0xf]
    %v95 = vld [vmem:[#allocation5 + $0x2c] sm:$0xf]
    %v96 = vld [vmem:[#allocation5 + $0x30] sm:$0xf]
    %v97 = vld [vmem:[#allocation5 + $0x34] sm:$0xf]
    %v98 = vld [vmem:[#allocation5 + $0x38] sm:$0xf]
    %v99 = vld [vmem:[#allocation5 + $0x3c] sm:$0xf]
    %v100 = vld [vmem:[%s2] sm:$0x1]
    %v102 = vperm.slane %v100, 0
    %v120 = vunpack.c.l.b16 %v68
    %v121 = vunpack.c.l.b16 %v69
    %v122 = vunpack.c.l.b16 %v70
    %v123 = vunpack.c.l.b16 %v71
    %v124 = vunpack.c.l.b16 %v72
    %v125 = vunpack.c.l.b16 %v73
    %v126 = vunpack.c.l.b16 %v74
    %v127 = vunpack.c.l.b16 %v75
    %v128 = vunpack.c.l.b16 %v76
    %v129 = vunpack.c.l.b16 %v77
    %v130 = vunpack.c.l.b16 %v78
    %v131 = vunpack.c.l.b16 %v79
    %v132 = vunpack.c.l.b16 %v80
    %v133 = vunpack.c.l.b16 %v81
    %v134 = vunpack.c.l.b16 %v82
    %v135 = vunpack.c.l.b16 %v83
    %v136 = vpack.c.b16 %v121, %v120
    %v137 = vpack.c.b16 %v123, %v122
    %v138 = vpack.c.b16 %v125, %v124
    %v139 = vpack.c.b16 %v127, %v126
    %v140 = vpack.c.b16 %v129, %v128
    %v141 = vpack.c.b16 %v131, %v130
    %v142 = vpack.c.b16 %v133, %v132
    %v143 = vpack.c.b16 %v135, %v134
    %v168 = vunpack.c.l.b16 %v84
    %v169 = vunpack.c.l.b16 %v85
    %v170 = vunpack.c.l.b16 %v86
    %v171 = vunpack.c.l.b16 %v87
    %v172 = vunpack.c.l.b16 %v88
    %v173 = vunpack.c.l.b16 %v89
    %v174 = vunpack.c.l.b16 %v90
    %v175 = vunpack.c.l.b16 %v91
    %v176 = vunpack.c.l.b16 %v92
    %v177 = vunpack.c.l.b16 %v93
    %v178 = vunpack.c.l.b16 %v94
    %v179 = vunpack.c.l.b16 %v95
    %v180 = vunpack.c.l.b16 %v96
    %v181 = vunpack.c.l.b16 %v97
    %v182 = vunpack.c.l.b16 %v98
    %v183 = vunpack.c.l.b16 %v99
    %v184 = vpack.c.b16 %v169, %v168
    %v185 = vpack.c.b16 %v171, %v170
    %v186 = vpack.c.b16 %v173, %v172
    %v187 = vpack.c.b16 %v175, %v174
    %v188 = vpack.c.b16 %v177, %v176
    %v189 = vpack.c.b16 %v179, %v178
    %v190 = vpack.c.b16 %v181, %v180
    %v191 = vpack.c.b16 %v183, %v182
    %200 = vmatpush.bf16.msra.mxu0 %v191
    %201 = vmatpush.bf16.msra.mxu0 %v190
    %202 = vmatpush.bf16.msra.mxu0 %v189
    %203 = vmatpush.bf16.msra.mxu0 %v188
    %204 = vmatpush.bf16.msra.mxu0 %v187
    %205 = vmatpush.bf16.msra.mxu0 %v186
    %206 = vmatpush.bf16.msra.mxu0 %v185
    %207 = vmatpush.bf16.msra.mxu0 %v184
    %208 = vmatmul.bf16.gmra.mxu0 %v136
    %v209 = vpop.f32.mrf.mxu0
    %v210 = vadd.f32 %v102, %v209
    %v211 = vpop.f32.mrf.mxu0
    %v212 = vadd.f32 %v102, %v211
    %213 = vmatmul.bf16.gmra.mxu0 %v137
    %v214 = vpop.f32.mrf.mxu0
    %v215 = vadd.f32 %v102, %v214
    %v216 = vpop.f32.mrf.mxu0
    %v217 = vadd.f32 %v102, %v216
    %218 = vmatmul.bf16.gmra.mxu0 %v138
    %v219 = vpop.f32.mrf.mxu0
    %v220 = vadd.f32 %v102, %v219
    %v221 = vpop.f32.mrf.mxu0
    %v222 = vadd.f32 %v102, %v221
    %223 = vmatmul.bf16.gmra.mxu0 %v139
    %v224 = vpop.f32.mrf.mxu0
    %v225 = vadd.f32 %v102, %v224
    %v226 = vpop.f32.mrf.mxu0
    %v227 = vadd.f32 %v102, %v226
    %228 = vmatmul.bf16.gmra.mxu0 %v140
    %v229 = vpop.f32.mrf.mxu0
    %v230 = vadd.f32 %v102, %v229
    %v231 = vpop.f32.mrf.mxu0
    %v232 = vadd.f32 %v102, %v231
    %233 = vmatmul.bf16.gmra.mxu0 %v141
    %v234 = vpop.f32.mrf.mxu0
    %v235 = vadd.f32 %v102, %v234
    %v236 = vpop.f32.mrf.mxu0
    %v237 = vadd.f32 %v102, %v236
    %238 = vmatmul.bf16.gmra.mxu0 %v142
    %v239 = vpop.f32.mrf.mxu0
    %v240 = vadd.f32 %v102, %v239
    %v241 = vpop.f32.mrf.mxu0
    %v242 = vadd.f32 %v102, %v241
    %243 = vmatmul.bf16.gmra.mxu0 %v143
    %v244 = vpop.f32.mrf.mxu0
    %v245 = vadd.f32 %v102, %v244
    %v246 = vpop.f32.mrf.mxu0
    %v247 = vadd.f32 %v102, %v246
    %248 = vdwg.mxu0
    %v249 = vmax.f32 %v210, 0.0
    %v250 = vmax.f32 %v212, 0.0
    %v251 = vmax.f32 %v215, 0.0
    %v252 = vmax.f32 %v217, 0.0
    %v253 = vmax.f32 %v220, 0.0
    %v254 = vmax.f32 %v222, 0.0
    %v255 = vmax.f32 %v225, 0.0
    %v256 = vmax.f32 %v227, 0.0
    %v257 = vmax.f32 %v230, 0.0
    %v258 = vmax.f32 %v232, 0.0
    %v259 = vmax.f32 %v235, 0.0
    %v260 = vmax.f32 %v237, 0.0
    %v261 = vmax.f32 %v240, 0.0
    %v262 = vmax.f32 %v242, 0.0
    %v263 = vmax.f32 %v245, 0.0
    %v264 = vmax.f32 %v247, 0.0
    %v265 = vpack.c.bf16 %v250, %v249
    %v266 = vpack.c.bf16 %v252, %v251
    %v267 = vpack.c.bf16 %v254, %v253
    %v268 = vpack.c.bf16 %v256, %v255
    %v269 = vpack.c.bf16 %v258, %v257
    %v270 = vpack.c.bf16 %v260, %v259
    %v271 = vpack.c.bf16 %v262, %v261
    %v272 = vpack.c.bf16 %v264, %v263
    %v273 = vld [vmem:[#allocation7] sm:$0xf]
    %v274 = vld [vmem:[#allocation7 + $0x4] sm:$0xf]
    %v275 = vld [vmem:[#allocation7 + $0x8] sm:$0xf]
    %v276 = vld [vmem:[#allocation7 + $0xc] sm:$0xf]
    %v277 = vld [vmem:[#allocation7 + $0x10] sm:$0xf]
    %v278 = vld [vmem:[#allocation7 + $0x14] sm:$0xf]
    %v279 = vld [vmem:[#allocation7 + $0x18] sm:$0xf]
    %v280 = vld [vmem:[#allocation7 + $0x1c] sm:$0xf]
    %v281 = vld [vmem:[#allocation7 + $0x20] sm:$0xf]
    %v282 = vld [vmem:[#allocation7 + $0x24] sm:$0xf]
    %v283 = vld [vmem:[#allocation7 + $0x28] sm:$0xf]
    %v284 = vld [vmem:[#allocation7 + $0x2c] sm:$0xf]
    %v285 = vld [vmem:[#allocation7 + $0x30] sm:$0xf]
    %v286 = vld [vmem:[#allocation7 + $0x34] sm:$0xf]
    %v287 = vld [vmem:[#allocation7 + $0x38] sm:$0xf]
    %v288 = vld [vmem:[#allocation7 + $0x3c] sm:$0xf]
    %v289 = vld [vmem:[%s4] sm:$0x1]
    %v291 = vperm.slane %v289, 0
    %v309 = vunpack.c.l.b16 %v273
    %v310 = vunpack.c.l.b16 %v274
    %v311 = vunpack.c.l.b16 %v275
    %v312 = vunpack.c.l.b16 %v276
    %v313 = vunpack.c.l.b16 %v277
    %v314 = vunpack.c.l.b16 %v278
    %v315 = vunpack.c.l.b16 %v279
    %v316 = vunpack.c.l.b16 %v280
    %v317 = vunpack.c.l.b16 %v281
    %v318 = vunpack.c.l.b16 %v282
    %v319 = vunpack.c.l.b16 %v283
    %v320 = vunpack.c.l.b16 %v284
    %v321 = vunpack.c.l.b16 %v285
    %v322 = vunpack.c.l.b16 %v286
    %v323 = vunpack.c.l.b16 %v287
    %v324 = vunpack.c.l.b16 %v288
    %v325 = vpack.c.b16 %v310, %v309
    %v326 = vpack.c.b16 %v312, %v311
    %v327 = vpack.c.b16 %v314, %v313
    %v328 = vpack.c.b16 %v316, %v315
    %v329 = vpack.c.b16 %v318, %v317
    %v330 = vpack.c.b16 %v320, %v319
    %v331 = vpack.c.b16 %v322, %v321
    %v332 = vpack.c.b16 %v324, %v323
    %341 = vmatpush.bf16.msra.mxu0 %v332
    %342 = vmatpush.bf16.msra.mxu0 %v331
    %343 = vmatpush.bf16.msra.mxu0 %v330
    %344 = vmatpush.bf16.msra.mxu0 %v329
    %345 = vmatpush.bf16.msra.mxu0 %v328
    %346 = vmatpush.bf16.msra.mxu0 %v327
    %347 = vmatpush.bf16.msra.mxu0 %v326
    %348 = vmatpush.bf16.msra.mxu0 %v325
    %349 = vmatmul.bf16.gmra.mxu0 %v265
    %v350 = vpop.f32.mrf.mxu0
    %v351 = vadd.f32 %v291, %v350
    %v352 = vpop.f32.mrf.mxu0
    %v353 = vadd.f32 %v291, %v352
    %354 = vmatmul.bf16.gmra.mxu0 %v266
    %v355 = vpop.f32.mrf.mxu0
    %v356 = vadd.f32 %v291, %v355
    %v357 = vpop.f32.mrf.mxu0
    %v358 = vadd.f32 %v291, %v357
    %359 = vmatmul.bf16.gmra.mxu0 %v267
    %v360 = vpop.f32.mrf.mxu0
    %v361 = vadd.f32 %v291, %v360
    %v362 = vpop.f32.mrf.mxu0
    %v363 = vadd.f32 %v291, %v362
    %364 = vmatmul.bf16.gmra.mxu0 %v268
    %v365 = vpop.f32.mrf.mxu0
    %v366 = vadd.f32 %v291, %v365
    %v367 = vpop.f32.mrf.mxu0
    %v368 = vadd.f32 %v291, %v367
    %369 = vmatmul.bf16.gmra.mxu0 %v269
    %v370 = vpop.f32.mrf.mxu0
    %v371 = vadd.f32 %v291, %v370
    %v372 = vpop.f32.mrf.mxu0
    %v373 = vadd.f32 %v291, %v372
    %374 = vmatmul.bf16.gmra.mxu0 %v270
    %v375 = vpop.f32.mrf.mxu0
    %v376 = vadd.f32 %v291, %v375
    %v377 = vpop.f32.mrf.mxu0
    %v378 = vadd.f32 %v291, %v377
    %379 = vmatmul.bf16.gmra.mxu0 %v271
    %v380 = vpop.f32.mrf.mxu0
    %v381 = vadd.f32 %v291, %v380
    %v382 = vpop.f32.mrf.mxu0
    %v383 = vadd.f32 %v291, %v382
    %384 = vmatmul.bf16.gmra.mxu0 %v272
    %v385 = vpop.f32.mrf.mxu0
    %v386 = vadd.f32 %v291, %v385
    %v387 = vpop.f32.mrf.mxu0
    %v388 = vadd.f32 %v291, %v387
    %389 = vdwg.mxu0
    %v390 = vmax.f32 %v351, 0.0
    %v391 = vmax.f32 %v353, 0.0
    %v392 = vmax.f32 %v356, 0.0
    %v393 = vmax.f32 %v358, 0.0
    %v394 = vmax.f32 %v361, 0.0
    %v395 = vmax.f32 %v363, 0.0
    %v396 = vmax.f32 %v366, 0.0
    %v397 = vmax.f32 %v368, 0.0
    %v398 = vmax.f32 %v371, 0.0
    %v399 = vmax.f32 %v373, 0.0
    %v400 = vmax.f32 %v376, 0.0
    %v401 = vmax.f32 %v378, 0.0
    %v402 = vmax.f32 %v381, 0.0
    %v403 = vmax.f32 %v383, 0.0
    %v404 = vmax.f32 %v386, 0.0
    %v405 = vmax.f32 %v388, 0.0
    %v406 = vpack.c.bf16 %v390, %v390
    %v407 = vpack.c.bf16 %v391, %v391
    %v408 = vpack.c.bf16 %v392, %v392
    %v409 = vpack.c.bf16 %v393, %v393
    %v410 = vpack.c.bf16 %v394, %v394
    %v411 = vpack.c.bf16 %v395, %v395
    %v412 = vpack.c.bf16 %v396, %v396
    %v413 = vpack.c.bf16 %v397, %v397
    %v414 = vpack.c.bf16 %v398, %v398
    %v415 = vpack.c.bf16 %v399, %v399
    %v416 = vpack.c.bf16 %v400, %v400
    %v417 = vpack.c.bf16 %v401, %v401
    %v418 = vpack.c.bf16 %v402, %v402
    %v419 = vpack.c.bf16 %v403, %v403
    %v420 = vpack.c.bf16 %v404, %v404
    %v421 = vpack.c.bf16 %v405, %v405
    %422 = vst [vmem:[#allocation8] sm:$0xf] %v406
    %423 = vst [vmem:[#allocation8 + $0x4] sm:$0xf] %v407
    %424 = vst [vmem:[#allocation8 + $0x8] sm:$0xf] %v408
    %425 = vst [vmem:[#allocation8 + $0xc] sm:$0xf] %v409
    %426 = vst [vmem:[#allocation8 + $0x10] sm:$0xf] %v410
    %427 = vst [vmem:[#allocation8 + $0x14] sm:$0xf] %v411
    %428 = vst [vmem:[#allocation8 + $0x18] sm:$0xf] %v412
    %429 = vst [vmem:[#allocation8 + $0x1c] sm:$0xf] %v413
    %430 = vst [vmem:[#allocation8 + $0x20] sm:$0xf] %v414
    %431 = vst [vmem:[#allocation8 + $0x24] sm:$0xf] %v415
    %432 = vst [vmem:[#allocation8 + $0x28] sm:$0xf] %v416
    %433 = vst [vmem:[#allocation8 + $0x2c] sm:$0xf] %v417
    %434 = vst [vmem:[#allocation8 + $0x30] sm:$0xf] %v418
    %435 = vst [vmem:[#allocation8 + $0x34] sm:$0xf] %v419
    %436 = vst [vmem:[#allocation8 + $0x38] sm:$0xf] %v420
    %437 = vst [vmem:[#allocation8 + $0x3c] sm:$0xf] %v421
    // Predicated region
    $region34: #{tpu_custom_call.1} parent=1 // pred_check
      _
    $region35: #{tpu_custom_call.1} parent=1 // pred_check_branch
      %439 = sbr.rel (0) target = $region37
    $region36: #{tpu_custom_call.1} parent=1 // pred_region
      %441 = vsyncadd [#allocation4], 0
      %s442 = sshll.u32 [#allocation8], 4
      %s443 = int_to_ptr.vmem [resolvable:$true] %s442
      %s444 = sshll.u32 %s5, 4
      %s445 = int_to_ptr.hbm [resolvable:$true] %s444
      %450 = dma.vmem_to_hbm [thread:$0]  %s443, 1024, %s445, [#allocation4], 64, 64, 4
    $region37: #{tpu_custom_call.1} parent=1 // pred_fallthru
      _
    // Predicated region
    $region38: #{tpu_custom_call.1} parent=1 // pred_check
      _
    $region39: #{tpu_custom_call.1} parent=1 // pred_check_branch
      %452 = sbr.rel (0) target = $region41
    $region40: #{tpu_custom_call.1} parent=1 // pred_region
      %454 = dma.done [#allocation4], 1024
    $region41: #{tpu_custom_call.1} parent=1 // pred_fallthru
      _
    %455 = vsyncpa [#allocation3], 1
    %456 = vsyncpa [#allocation6], 1
    %457 = vsyncpa [#allocation4], 1

</llo_original>
